<compile_context>
chip_gen: v7x
topology: tpu7x:2x2x1
jax: 0.10.0
libtpu: 0.0.40
codegen_flags: <defaults>
</compile_context>

<pallas_src>
import jax
import jax.numpy as jnp
from jax.experimental import pallas as pl
from jax.experimental.pallas import tpu as pltpu

_LANES = 128
_SP_THRESHOLD = 20.0  # same guard PyTorch softplus uses


def _mish_kernel(x_ref, o_ref):
    x = x_ref[...]
    xf = x.astype(jnp.float32)
    # tanh(softplus(x)) = t(t+2) / (t(t+2) + 2), t = exp(x)
    #   (softplus(x) = log(1+t);  tanh(y) = (e^{2y}-1)/(e^{2y}+1);  e^{2y} = (1+t)^2)
    t = jnp.exp(jnp.minimum(xf, _SP_THRESHOLD))        # clamp avoids overflow
    u = t * (t + 2.0)
    d = u + 2.0
    r = pl.reciprocal(d, approx=True)                  # EUP, nearly free slot
    r = r * (2.0 - d * r)                              # Newton step (VPU) -> ~f32 accuracy
    y = jnp.where(xf > _SP_THRESHOLD, xf, xf * u * r)  # for x>20, tanh(sp(x)) ~= 1
    o_ref[...] = y.astype(o_ref.dtype)


def mish(x):
    """Mish(x) = x * tanh(softplus(x)), elementwise, any shape/dtype."""
    orig_shape = x.shape
    orig_dtype = x.dtype
    n = x.size

    # Lane-dense 2D layout: (rows, 128). Pad once (single XLA op) if needed.
    flat = x.reshape(-1)
    padded = False
    if n % _LANES != 0:
        flat = jnp.pad(flat, (0, _LANES - (n % _LANES)))
        padded = True
    rows = flat.shape[0] // _LANES
    x2d = flat.reshape(rows, _LANES)

    # ~1 MiB per block; TR multiple of 16 so bf16 (16,128) tiling is respected too.
    itemsize = jnp.dtype(orig_dtype).itemsize
    target_block_bytes = 1 << 20
    tr_cap = max(16, (target_block_bytes // (_LANES * itemsize)) // 16 * 16)
    tr = rows if rows <= tr_cap else tr_cap            # small inputs: one full block
    grid = (pl.cdiv(rows, tr),)                        # partial last block handled by Pallas

    cost = pl.CostEstimate(
        flops=6 * rows * _LANES,
        transcendentals=2 * rows * _LANES,
        bytes_accessed=2 * rows * _LANES * itemsize,
    )

    out2d = pl.pallas_call(
        _mish_kernel,
        out_shape=jax.ShapeDtypeStruct((rows, _LANES), orig_dtype),
        grid_spec=pltpu.PrefetchScalarGridSpec(
            num_scalar_prefetch=0,
            grid=grid,
            in_specs=[pl.BlockSpec((tr, _LANES), lambda i: (i, 0))],
            out_specs=pl.BlockSpec((tr, _LANES), lambda i: (i, 0)),
        ),
        compiler_params=pltpu.CompilerParams(
            dimension_semantics=("parallel",),
        ),
        cost_estimate=cost,
    )(x2d)

    out_flat = out2d.reshape(-1)
    if padded:
        out_flat = out_flat[:n]
    return out_flat.reshape(orig_shape)


def mish_ref(x):
    xf = x.astype(jnp.float32)
    sp = jnp.where(xf > _SP_THRESHOLD, xf,
                   jnp.log1p(jnp.exp(jnp.minimum(xf, _SP_THRESHOLD))))
    return (xf * jnp.tanh(sp)).astype(x.dtype)


if __name__ == "__main__":
    key = jax.random.PRNGKey(0)
    # NCHW, like the PyTorch module would see from a conv stack.
    x = jax.random.normal(key, (2, 4, 16, 16), dtype=jnp.float32) * 3.0

    y = mish(x)
    jax.block_until_ready(y)

    y_ref = mish_ref(x)
    assert y.shape == x.shape and y.dtype == x.dtype
    assert jnp.max(jnp.abs(y - y_ref)) < 1e-4

    print("KERNEL_OK")
</pallas_src>

<mosaic_0001>
module attributes {stable_mosaic.version = 11 : i64} {
  func.func @_mish_kernel(%arg0: i32, %arg1: memref<16x128xf32, #tpu.memory_space<vmem>>, %arg2: memref<16x128xf32, #tpu.memory_space<vmem>>) attributes {dimension_semantics = [#tpu.dimension_semantics<parallel>], iteration_bounds = array<i64: 1>, scalar_prefetch = 0 : i64, scratch_operands = 0 : i64, tpu.core_type = #tpu.core_type<tc>, window_params = [{transform_indices = @transform_0, window_bounds = array<i64: 16, 128>}, {transform_indices = @transform_1, window_bounds = array<i64: 16, 128>}]} {
    %c0 = arith.constant 0 : index
    %c0_0 = arith.constant 0 : index
    %0 = vector.load %arg1[%c0, %c0_0] : memref<16x128xf32, #tpu.memory_space<vmem>>, vector<16x128xf32>
    %cst = arith.constant 2.000000e+01 : f32
    %1 = vector.broadcast %cst : f32 to vector<16x128xf32>
    %2 = arith.minimumf %0, %1 : vector<16x128xf32>
    %3 = math.exp %2 : vector<16x128xf32>
    %cst_1 = arith.constant 2.000000e+00 : f32
    %4 = vector.broadcast %cst_1 : f32 to vector<16x128xf32>
    %5 = arith.addf %3, %4 : vector<16x128xf32>
    %6 = arith.mulf %3, %5 : vector<16x128xf32>
    %cst_2 = arith.constant 2.000000e+00 : f32
    %7 = vector.broadcast %cst_2 : f32 to vector<16x128xf32>
    %8 = arith.addf %6, %7 : vector<16x128xf32>
    %9 = tpu.reciprocal %8 {approx = true} : vector<16x128xf32> -> vector<16x128xf32>
    %10 = arith.mulf %8, %9 : vector<16x128xf32>
    %cst_3 = arith.constant 2.000000e+00 : f32
    %11 = vector.broadcast %cst_3 : f32 to vector<16x128xf32>
    %12 = arith.subf %11, %10 : vector<16x128xf32>
    %13 = arith.mulf %9, %12 : vector<16x128xf32>
    %cst_4 = arith.constant 2.000000e+01 : f32
    %14 = vector.broadcast %cst_4 : f32 to vector<16x128xf32>
    %15 = arith.cmpf ogt, %0, %14 : vector<16x128xf32>
    %16 = arith.mulf %0, %6 : vector<16x128xf32>
    %17 = arith.mulf %16, %13 : vector<16x128xf32>
    %18 = arith.select %15, %0, %17 : vector<16x128xi1>, vector<16x128xf32>
    %c0_5 = arith.constant 0 : index
    %c0_6 = arith.constant 0 : index
    %19 = vector.load %arg2[%c0_5, %c0_6] : memref<16x128xf32, #tpu.memory_space<vmem>>, vector<16x128xf32>
    tpu.vector_store %arg2[%c0_5, %c0_6], %18 {strides = array<i32>} : memref<16x128xf32, #tpu.memory_space<vmem>>, vector<16x128xf32>,
    return
  }
  func.func @transform_0(%arg0: i32) -> (i32, i32) {
    %c0_i32 = arith.constant 0 : i32
    %c0_i32_0 = arith.constant 0 : i32
    return %arg0, %c0_i32 : i32, i32
  }
  func.func @transform_1(%arg0: i32) -> (i32, i32) {
    %c0_i32 = arith.constant 0 : i32
    %c0_i32_0 = arith.constant 0 : i32
    return %arg0, %c0_i32 : i32, i32
  }
}

</mosaic_0001>

<llo_original>
// kernel: tpu_custom_call.1
$region0: #{tpu_custom_call.1}
  #allocation0 [shape = 'u32[]', space=smem, size = 0x4, offset = 0x4, fixed_abs, tag = 'smem constant byte address 0x4 - core index']
  #allocation1 [shape = 'u32[144,128]{1,0:T(1,128)}', space=vmem, size = 0x12000, scoped, tag = 'internal scratch']
  %s0 = inlined_call_operand.hbm [shape: f32[16,128], index: 0, kind: input, shape index: {}]
  %s1 = inlined_call_operand.hbm [shape: f32[16,128], index: 1, kind: output, shape index: {}]
  %s2 = sld [smem:[#allocation0]]
  $region18: #{tpu_custom_call.1} parent=0
    _
  %s4 = ssub.s32 1, %s2
  %s5 = scalar_select 0, %s4, %s2
  $region1: #{tpu_custom_call.1} parent=0
    #allocation2 [shape = 'u8[8192]{0}', space=vmem, size = 0x2000, scoped, tag = 'input window, operand 0, single buffered']
    #allocation3 [shape = 's32[1]{0}', space=sflag, size = 0x4, scoped, tag = 'scoped memory for tpu_custom_call.1']
    #allocation4 [shape = 's32[1]{0}', space=sflag, size = 0x4, scoped, tag = 'scoped memory for tpu_custom_call.1']
    #allocation5 [shape = 'u8[8192]{0}', space=vmem, size = 0x2000, scoped, tag = 'output window, operand 0, single buffered']
    %6 = vsyncpa [#allocation3], 0
    %7 = vsyncpa [#allocation4], 0
    // Predicated region
    $region2: #{tpu_custom_call.1} parent=1 // pred_check
      _
    $region3: #{tpu_custom_call.1} parent=1 // pred_check_branch
      %9 = sbr.rel (0) target = $region5
    $region4: #{tpu_custom_call.1} parent=1 // pred_region
      %s11 = ssub.s32 256, 256
      %12 = vsyncadd [#allocation3], %s11
      %s13 = sshll.u32 [#allocation2], 4
      %s14 = int_to_ptr.vmem [resolvable:$true] %s13
      %19 = dma.hbm_to_vmem [thread:$0]  %s0, 256, %s14, [#allocation3], 128, 128, 8
    $region5: #{tpu_custom_call.1} parent=1 // pred_fallthru
      _
    // Predicated region
    $region6: #{tpu_custom_call.1} parent=1 // pred_check
      _
    $region7: #{tpu_custom_call.1} parent=1 // pred_check_branch
      %21 = sbr.rel (0) target = $region9
    $region8: #{tpu_custom_call.1} parent=1 // pred_region
      %22 = dma.done [#allocation3], 256
    $region9: #{tpu_custom_call.1} parent=1 // pred_fallthru
      _
    %v23 = vld [vmem:[#allocation2] sm:$0xff]
    %v24 = vld [vmem:[#allocation2 + $0x8] sm:$0xff]
    %v25 = vmin.f32 %v23, 20.0
    %v26 = vmin.f32 %v24, 20.0
    %v27 = vmul.f32 %v25, 1.442695
    %v28 = vpow.pop %v27
    %v29 = vmul.f32 %v26, 1.442695
    %v30 = vpow.pop %v29
    %v31 = vadd.f32 %v28, 2.0
    %v32 = vadd.f32 %v30, 2.0
    %v33 = vmul.f32 %v28, %v31
    %v34 = vmul.f32 %v30, %v32
    %v35 = vadd.f32 %v33, 2.0
    %v36 = vadd.f32 %v34, 2.0
    %v37 = vrcp.pop %v35
    %v38 = vrcp.pop %v36
    %v39 = vmul.f32 %v35, %v37
    %v40 = vmul.f32 %v36, %v38
    %v41 = vsub.f32 2.0, %v39
    %v42 = vsub.f32 2.0, %v40
    %v43 = vmul.f32 %v37, %v41
    %v44 = vmul.f32 %v38, %v42
    %vm45 = vcmp.gt.f32.partialorder %v23, 20.0
    %vm46 = vcmp.gt.f32.partialorder %v24, 20.0
    %v47 = vmul.f32 %v23, %v33
    %v48 = vmul.f32 %v24, %v34
    %v49 = vmul.f32 %v47, %v43
    %v50 = vmul.f32 %v48, %v44
    %v51 = vsel %vm45, %v23, %v49
    %v52 = vsel %vm46, %v24, %v50
    %53 = vst [vmem:[#allocation5] sm:$0xff] %v51
    %54 = vst [vmem:[#allocation5 + $0x8] sm:$0xff] %v52
    // Predicated region
    $region10: #{tpu_custom_call.1} parent=1 // pred_check
      _
    $region11: #{tpu_custom_call.1} parent=1 // pred_check_branch
      %56 = sbr.rel (0) target = $region13
    $region12: #{tpu_custom_call.1} parent=1 // pred_region
      %s58 = ssub.s32 256, 256
      %59 = vsyncadd [#allocation4], %s58
      %s60 = sshll.u32 [#allocation5], 4
      %s61 = int_to_ptr.vmem [resolvable:$true] %s60
      %66 = dma.vmem_to_hbm [thread:$0]  %s61, 256, %s1, [#allocation4], 128, 128, 8
    $region13: #{tpu_custom_call.1} parent=1 // pred_fallthru
      _
    // Predicated region
    $region14: #{tpu_custom_call.1} parent=1 // pred_check
      _
    $region15: #{tpu_custom_call.1} parent=1 // pred_check_branch
      %68 = sbr.rel (0) target = $region17
    $region16: #{tpu_custom_call.1} parent=1 // pred_region
      %69 = dma.done [#allocation4], 256
    $region17: #{tpu_custom_call.1} parent=1 // pred_fallthru
      _
    %70 = vsyncpa [#allocation3], 1
    %71 = vsyncpa [#allocation4], 1

</llo_original>
